<compile_context>
chip_gen: v7x
topology: tpu7x:2x2x1
jax: 0.10.0
libtpu: 0.0.40
codegen_flags: <defaults>
</compile_context>

<pallas_src>
import jax
import jax.numpy as jnp
from jax.experimental import pallas as pl
from jax.experimental.pallas import tpu as pltpu


def _make_wave_block_kernel(T_orig, num_rates, ksize, c_out, compute_dtype):
    """Builds the kernel body; all shape/shift parameters are static."""
    exact_sigmoid = (compute_dtype == jnp.float32)

    def kernel(x_ref, t_ref, w0_ref, b0_ref, fgw_ref, fgb_ref, cw_ref, cb_ref,
               o_ref):
        x = x_ref[...]                       # (Cin, L)  compute_dtype
        L = x.shape[1]                       # static: batch_block * T_pad
        # Per-lane local time index (position inside its batch segment),
        # precomputed in the wrapper.
        t_local = t_ref[...]                 # (1, L) int32

        # Initial 1x1 conv: one channel matmul on the MXU, f32 accumulation.
        h = jnp.dot(w0_ref[...], x, preferred_element_type=jnp.float32)
        h = h + b0_ref[...]
        res = h

        for i in range(num_rates):           # static unroll (R is small)
            d = 2 ** i
            pad = d * (ksize - 1) // 2

            # Build the K shifted taps (XLU lane rolls + vreg selects) and stack
            # them along sublanes -> ONE deep-contraction matmul per layer.
            taps = []
            for k in range(ksize):
                s = k * d - pad              # static shift
                if s == 0:
                    hs = h
                else:
                    # rolled[:, t] = h[:, (t + s) mod L]; mask implements the
                    # conv zero padding and blocks cross-batch-seam reads.
                    rolled = pltpu.roll(h, (-s) % L, axis=1)
                    valid = jnp.logical_and(t_local >= -s, t_local < T_orig - s)
                    hs = jnp.where(valid, rolled, 0.0)
                taps.append(hs.astype(compute_dtype))
            hs_cat = jnp.concatenate(taps, axis=0)             # (K*C, L)

            # Fused filter+gate dilated conv: (2C, K*C) @ (K*C, L) on the MXU.
            acc = jnp.dot(fgw_ref[i], hs_cat,
                          preferred_element_type=jnp.float32) + fgb_ref[i]

            f = jnp.tanh(acc[:c_out])                          # EUP
            z = acc[c_out:]
            if exact_sigmoid:
                g = 1.0 / (1.0 + jnp.exp(-z))                  # exact-check path
            else:
                g = pl.reciprocal(1.0 + jnp.exp(-z), approx=True)  # EUP-only
            gated = (f * g).astype(compute_dtype)

            # 1x1 conv + residual (f32 accumulation / residual chain).
            h = jnp.dot(cw_ref[i], gated,
                        preferred_element_type=jnp.float32) + cb_ref[i]
            res = res + h

        o_ref[...] = res.astype(o_ref.dtype)

    return kernel


def wave_block(x, w0, b0, filter_w, filter_b, gate_w, gate_b, conv_w, conv_b,
               kernel_size, *, compute_dtype=jnp.bfloat16, batch_block=None):
    """Wave_Block forward.

    x:        (B, Cin, T) f32
    w0, b0:   convs[0]          -- (Cout, Cin, 1), (Cout,)
    filter_w: (R, Cout, Cout, K); filter_b: (R, Cout)
    gate_w:   (R, Cout, Cout, K); gate_b:   (R, Cout)
    conv_w:   (R, Cout, Cout, 1); conv_b:   (R, Cout)   -- convs[1:]

    compute_dtype: dtype of the MXU matmul operands (bf16 recommended).  All
    accumulation / gating / residual math stays f32.
    """
    B, Cin, T = x.shape
    Cout = w0.shape[0]
    R = filter_w.shape[0]
    K = kernel_size
    # 'same'-length output only holds for odd kernel_size (matches PyTorch).
    assert K % 2 == 1, "Wave_Block Pallas kernel assumes odd kernel_size"

    # ---- lane-dense layout: fold batch into the lane (time) axis -----------
    T_pad = ((T + 127) // 128) * 128          # lane-dense (multiple of 128)
    if batch_block is None:
        # pack batches per grid step to amortize per-step overhead (~0.35us)
        # while keeping the per-step lane width (and VMEM live set) bounded.
        batch_block = max(1, min(B, 2048 // T_pad))
    B_pad = ((B + batch_block - 1) // batch_block) * batch_block
    L = batch_block * T_pad
    num_steps = B_pad // batch_block

    xp = jnp.transpose(x, (1, 0, 2))                             # (Cin, B, T)
    xp = jnp.pad(xp, ((0, 0), (0, B_pad - B), (0, T_pad - T)))
    x2d = xp.reshape(Cin, B_pad * T_pad).astype(compute_dtype)   # (Cin, Bp*Tp)

    # Local time index of every lane (position within its batch segment).
    t_idx = (jnp.arange(B_pad * T_pad, dtype=jnp.int32) % T_pad).reshape(1, -1)

    # ---- weight plumbing (all transposes/reshapes wrapper-side) ------------
    w0_2d = w0[:, :, 0].astype(compute_dtype)                    # (Cout, Cin)
    b0_2d = b0.reshape(Cout, 1).astype(jnp.float32)
    # filter+gate fused; taps folded into the contraction axis:
    #   fg_w[r, o, k*C + c] = [filter;gate][r, o, c, k]
    fg_w = jnp.concatenate([filter_w, gate_w], axis=1)           # (R, 2C, C, K)
    fg_w = jnp.transpose(fg_w, (0, 1, 3, 2)).reshape(R, 2 * Cout, K * Cout)
    fg_w = fg_w.astype(compute_dtype)
    fg_b = jnp.concatenate([filter_b, gate_b], axis=1)
    fg_b = fg_b.reshape(R, 2 * Cout, 1).astype(jnp.float32)
    cw = conv_w[:, :, :, 0].astype(compute_dtype)                # (R, C, C)
    cb = conv_b.reshape(R, Cout, 1).astype(jnp.float32)

    kernel = _make_wave_block_kernel(T, R, K, Cout, compute_dtype)

    grid_spec = pltpu.PrefetchScalarGridSpec(
        num_scalar_prefetch=0,
        grid=(num_steps,),
        in_specs=[
            # Activations / lane-time-index: pipelined per batch group.
            pl.BlockSpec((Cin, L), lambda g: (0, g)),
            pl.BlockSpec((1, L), lambda g: (0, g)),
            # Weights / biases: constant index maps -> VMEM-resident, no re-DMA.
            pl.BlockSpec((Cout, Cin), lambda g: (0, 0)),
            pl.BlockSpec((Cout, 1), lambda g: (0, 0)),
            pl.BlockSpec((R, 2 * Cout, K * Cout), lambda g: (0, 0, 0)),
            pl.BlockSpec((R, 2 * Cout, 1), lambda g: (0, 0, 0)),
            pl.BlockSpec((R, Cout, Cout), lambda g: (0, 0, 0)),
            pl.BlockSpec((R, Cout, 1), lambda g: (0, 0, 0)),
        ],
        out_specs=pl.BlockSpec((Cout, L), lambda g: (0, g)),
    )

    out2d = pl.pallas_call(
        kernel,
        out_shape=jax.ShapeDtypeStruct((Cout, B_pad * T_pad), jnp.float32),
        grid_spec=grid_spec,
        compiler_params=pltpu.CompilerParams(
            dimension_semantics=("parallel",),       # batch groups -> megacore
            vmem_limit_bytes=48 * 1024 * 1024,       # > v5e 16MiB default, < v7x 64MiB
        ),
    )(x2d, t_idx, w0_2d, b0_2d, fg_w, fg_b, cw, cb)

    out = out2d.reshape(Cout, B_pad, T_pad)[:, :B, :T]
    return jnp.transpose(out, (1, 0, 2)).astype(x.dtype)


# ----------------------- pure-JAX reference (for checking) -----------------------
def _conv1d_ref(x, w, b, dilation, padding):
    out = jax.lax.conv_general_dilated(
        x, w, window_strides=(1,), padding=[(padding, padding)],
        rhs_dilation=(dilation,), dimension_numbers=("NCH", "OIH", "NCH"),
        precision=jax.lax.Precision.HIGHEST)
    return out + b[None, :, None]


def wave_block_reference(x, w0, b0, filter_w, filter_b, gate_w, gate_b,
                         conv_w, conv_b, kernel_size):
    h = _conv1d_ref(x, w0, b0, 1, 0)
    res = h
    for i in range(filter_w.shape[0]):
        d = 2 ** i
        pad = d * (kernel_size - 1) // 2
        f = jnp.tanh(_conv1d_ref(h, filter_w[i], filter_b[i], d, pad))
        g = jax.nn.sigmoid(_conv1d_ref(h, gate_w[i], gate_b[i], d, pad))
        h = _conv1d_ref(f * g, conv_w[i], conv_b[i], 1, 0)
        res = res + h
    return res


if __name__ == "__main__":
    key = jax.random.PRNGKey(0)
    B, Cin, Cout, T = 2, 4, 16, 96   # T deliberately NOT a multiple of 128
    R, K = 3, 3                      # dilation_rates=3 -> dilations 1,2,4

    keys = jax.random.split(key, 9)

    def uinit(k, shape, fan_in):
        bound = 1.0 / (fan_in ** 0.5)
        return jax.random.uniform(k, shape, jnp.float32, -bound, bound)

    x = jax.random.normal(keys[0], (B, Cin, T), jnp.float32)
    # Conv1d init: U(-1/sqrt(fan_in), 1/sqrt(fan_in)), fan_in = in_channels * k.
    w0 = uinit(keys[1], (Cout, Cin, 1), Cin)
    b0 = uinit(keys[2], (Cout,), Cin)
    filter_w = uinit(keys[3], (R, Cout, Cout, K), Cout * K)
    filter_b = uinit(keys[4], (R, Cout), Cout * K)
    gate_w = uinit(keys[5], (R, Cout, Cout, K), Cout * K)
    gate_b = uinit(keys[6], (R, Cout), Cout * K)
    conv_w = uinit(keys[7], (R, Cout, Cout, 1), Cout)
    conv_b = uinit(keys[8], (R, Cout), Cout)

    args = (x, w0, b0, filter_w, filter_b, gate_w, gate_b, conv_w, conv_b, K)
    ref = wave_block_reference(*args)

    # Exact-arithmetic path: f32 matmul operands + exact sigmoid, checked
    # against a precision=HIGHEST conv reference with a tight tolerance.
    out_f32 = jax.block_until_ready(wave_block(*args, compute_dtype=jnp.float32))
    assert out_f32.shape == (B, Cout, T) and out_f32.dtype == jnp.float32
    err_f32 = float(jnp.max(jnp.abs(out_f32 - ref)))
    assert err_f32 < 1e-2, f"f32 path: max abs error vs reference {err_f32}"

    # Production path: bf16 matmul operands, f32 accumulation/residual chain.
    out_bf16 = jax.block_until_ready(wave_block(*args, compute_dtype=jnp.bfloat16))
    assert out_bf16.shape == (B, Cout, T)
    err_bf16 = float(jnp.max(jnp.abs(out_bf16 - ref)))
    assert err_bf16 < 5e-2, f"bf16 path: max abs error vs reference {err_bf16}"

    print("KERNEL_OK")
</pallas_src>

<mosaic_0001>
module attributes {stable_mosaic.version = 11 : i64} {
  func.func @kernel(%arg0: i32, %arg1: memref<4x256xf32, #tpu.memory_space<vmem>>, %arg2: memref<1x256xi32, #tpu.memory_space<vmem>>, %arg3: memref<16x4xf32, #tpu.memory_space<vmem>>, %arg4: memref<16x1xf32, #tpu.memory_space<vmem>>, %arg5: memref<3x32x48xf32, #tpu.memory_space<vmem>>, %arg6: memref<3x32x1xf32, #tpu.memory_space<vmem>>, %arg7: memref<3x16x16xf32, #tpu.memory_space<vmem>>, %arg8: memref<3x16x1xf32, #tpu.memory_space<vmem>>, %arg9: memref<16x256xf32, #tpu.memory_space<vmem>>) attributes {dimension_semantics = [#tpu.dimension_semantics<parallel>], iteration_bounds = array<i64: 1>, scalar_prefetch = 0 : i64, scratch_operands = 0 : i64, tpu.core_type = #tpu.core_type<tc>, window_params = [{transform_indices = @transform_0, window_bounds = array<i64: 4, 256>}, {transform_indices = @transform_1, window_bounds = array<i64: 1, 256>}, {pipeline_mode = #tpu.pipeline_mode<synchronous>, transform_indices = @transform_2, window_bounds = array<i64: 16, 4>}, {pipeline_mode = #tpu.pipeline_mode<synchronous>, transform_indices = @transform_3, window_bounds = array<i64: 16, 1>}, {pipeline_mode = #tpu.pipeline_mode<synchronous>, transform_indices = @transform_4, window_bounds = array<i64: 3, 32, 48>}, {pipeline_mode = #tpu.pipeline_mode<synchronous>, transform_indices = @transform_5, window_bounds = array<i64: 3, 32, 1>}, {pipeline_mode = #tpu.pipeline_mode<synchronous>, transform_indices = @transform_6, window_bounds = array<i64: 3, 16, 16>}, {pipeline_mode = #tpu.pipeline_mode<synchronous>, transform_indices = @transform_7, window_bounds = array<i64: 3, 16, 1>}, {transform_indices = @transform_8, window_bounds = array<i64: 16, 256>}]} {
    %c0 = arith.constant 0 : index
    %c0_0 = arith.constant 0 : index
    %0 = vector.load %arg1[%c0, %c0_0] : memref<4x256xf32, #tpu.memory_space<vmem>>, vector<4x256xf32>
    %c0_1 = arith.constant 0 : index
    %c0_2 = arith.constant 0 : index
    %1 = vector.load %arg2[%c0_1, %c0_2] : memref<1x256xi32, #tpu.memory_space<vmem>>, vector<1x256xi32>
    %c0_3 = arith.constant 0 : index
    %c0_4 = arith.constant 0 : index
    %2 = vector.load %arg3[%c0_3, %c0_4] : memref<16x4xf32, #tpu.memory_space<vmem>>, vector<16x4xf32>
    %cst = arith.constant dense<0.000000e+00> : vector<16x256xf32>
    %3 = tpu.matmul %2, %0, %cst {dimension_numbers = #tpu.dot_dimension_numbers<[1], [0], [0], [1], [0, 0, 1, 1], [], []>} : vector<16x4xf32>, vector<4x256xf32>, vector<16x256xf32> -> vector<16x256xf32>
    %c0_5 = arith.constant 0 : index
    %c0_6 = arith.constant 0 : index
    %4 = vector.load %arg4[%c0_5, %c0_6] : memref<16x1xf32, #tpu.memory_space<vmem>>, vector<16x1xf32>
    %5 = vector.broadcast %4 : vector<16x1xf32> to vector<16x256xf32>
    %6 = arith.addf %3, %5 : vector<16x256xf32>
    %c1_i32 = arith.constant 1 : i32
    %7 = tpu.dynamic_rotate %6 by %c1_i32 dim 1 : vector<16x256xf32>, i32 -> vector<16x256xf32>
    %c1_i32_7 = arith.constant 1 : i32
    %8 = vector.broadcast %c1_i32_7 : i32 to vector<1x256xi32>
    %9 = arith.cmpi sge, %1, %8 : vector<1x256xi32>
    %c97_i32 = arith.constant 97 : i32
    %10 = vector.broadcast %c97_i32 : i32 to vector<1x256xi32>
    %11 = arith.cmpi slt, %1, %10 : vector<1x256xi32>
    %12 = arith.andi %9, %11 : vector<1x256xi1>
    %cst_8 = arith.constant 0.000000e+00 : f32
    %13 = vector.shape_cast %12 : vector<1x256xi1> to vector<1x256xi1>
    %14 = vector.broadcast %13 : vector<1x256xi1> to vector<16x256xi1>
    %15 = vector.broadcast %cst_8 : f32 to vector<16x256xf32>
    %16 = arith.select %14, %7, %15 : vector<16x256xi1>, vector<16x256xf32>
    %c255_i32 = arith.constant 255 : i32
    %17 = tpu.dynamic_rotate %6 by %c255_i32 dim 1 : vector<16x256xf32>, i32 -> vector<16x256xf32>
    %c-1_i32 = arith.constant -1 : i32
    %18 = vector.broadcast %c-1_i32 : i32 to vector<1x256xi32>
    %19 = arith.cmpi sge, %1, %18 : vector<1x256xi32>
    %c95_i32 = arith.constant 95 : i32
    %20 = vector.broadcast %c95_i32 : i32 to vector<1x256xi32>
    %21 = arith.cmpi slt, %1, %20 : vector<1x256xi32>
    %22 = arith.andi %19, %21 : vector<1x256xi1>
    %cst_9 = arith.constant 0.000000e+00 : f32
    %23 = vector.shape_cast %22 : vector<1x256xi1> to vector<1x256xi1>
    %24 = vector.broadcast %23 : vector<1x256xi1> to vector<16x256xi1>
    %25 = vector.broadcast %cst_9 : f32 to vector<16x256xf32>
    %26 = arith.select %24, %17, %25 : vector<16x256xi1>, vector<16x256xf32>
    %27 = tpu.concatenate %16, %6, %26 in 0 : vector<16x256xf32>, vector<16x256xf32>, vector<16x256xf32> -> vector<48x256xf32>
    %c0_10 = arith.constant 0 : index
    %c0_11 = arith.constant 0 : index
    %c0_12 = arith.constant 0 : index
    %28 = vector.load %arg5[%c0_10, %c0_11, %c0_12] : memref<3x32x48xf32, #tpu.memory_space<vmem>>, vector<1x32x48xf32>
    %29 = vector.shape_cast %28 : vector<1x32x48xf32> to vector<32x48xf32>
    %cst_13 = arith.constant dense<0.000000e+00> : vector<32x256xf32>
    %30 = tpu.matmul %29, %27, %cst_13 {dimension_numbers = #tpu.dot_dimension_numbers<[1], [0], [0], [1], [0, 0, 1, 1], [], []>} : vector<32x48xf32>, vector<48x256xf32>, vector<32x256xf32> -> vector<32x256xf32>
    %c0_14 = arith.constant 0 : index
    %c0_15 = arith.constant 0 : index
    %c0_16 = arith.constant 0 : index
    %31 = vector.load %arg6[%c0_14, %c0_15, %c0_16] : memref<3x32x1xf32, #tpu.memory_space<vmem>>, vector<1x32x1xf32>
    %32 = vector.shape_cast %31 : vector<1x32x1xf32> to vector<32x1xf32>
    %33 = vector.broadcast %32 : vector<32x1xf32> to vector<32x256xf32>
    %34 = arith.addf %30, %33 : vector<32x256xf32>
    %35 = vector.extract_strided_slice %34 {offsets = [0, 0], sizes = [16, 256], strides = [1, 1]} : vector<32x256xf32> to vector<16x256xf32>
    %36 = math.tanh %35 : vector<16x256xf32>
    %37 = vector.extract_strided_slice %34 {offsets = [16, 0], sizes = [16, 256], strides = [1, 1]} : vector<32x256xf32> to vector<16x256xf32>
    %cst_17 = arith.constant 0.000000e+00 : f32
    %38 = vector.broadcast %cst_17 : f32 to vector<16x256xf32>
    %39 = arith.subf %38, %37 : vector<16x256xf32>
    %40 = math.exp %39 : vector<16x256xf32>
    %cst_18 = arith.constant 1.000000e+00 : f32
    %41 = vector.broadcast %cst_18 : f32 to vector<16x256xf32>
    %42 = arith.addf %41, %40 : vector<16x256xf32>
    %cst_19 = arith.constant 1.000000e+00 : f32
    %43 = vector.broadcast %cst_19 : f32 to vector<16x256xf32>
    %44 = arith.divf %43, %42 : vector<16x256xf32>
    %45 = arith.mulf %36, %44 : vector<16x256xf32>
    %c0_20 = arith.constant 0 : index
    %c0_21 = arith.constant 0 : index
    %c0_22 = arith.constant 0 : index
    %46 = vector.load %arg7[%c0_20, %c0_21, %c0_22] : memref<3x16x16xf32, #tpu.memory_space<vmem>>, vector<1x16x16xf32>
    %47 = vector.shape_cast %46 : vector<1x16x16xf32> to vector<16x16xf32>
    %cst_23 = arith.constant dense<0.000000e+00> : vector<16x256xf32>
    %48 = tpu.matmul %47, %45, %cst_23 {dimension_numbers = #tpu.dot_dimension_numbers<[1], [0], [0], [1], [0, 0, 1, 1], [], []>} : vector<16x16xf32>, vector<16x256xf32>, vector<16x256xf32> -> vector<16x256xf32>
    %c0_24 = arith.constant 0 : index
    %c0_25 = arith.constant 0 : index
    %c0_26 = arith.constant 0 : index
    %49 = vector.load %arg8[%c0_24, %c0_25, %c0_26] : memref<3x16x1xf32, #tpu.memory_space<vmem>>, vector<1x16x1xf32>
    %50 = vector.shape_cast %49 : vector<1x16x1xf32> to vector<16x1xf32>
    %51 = vector.broadcast %50 : vector<16x1xf32> to vector<16x256xf32>
    %52 = arith.addf %48, %51 : vector<16x256xf32>
    %53 = arith.addf %6, %52 : vector<16x256xf32>
    %c2_i32 = arith.constant 2 : i32
    %54 = tpu.dynamic_rotate %52 by %c2_i32 dim 1 : vector<16x256xf32>, i32 -> vector<16x256xf32>
    %c2_i32_27 = arith.constant 2 : i32
    %55 = vector.broadcast %c2_i32_27 : i32 to vector<1x256xi32>
    %56 = arith.cmpi sge, %1, %55 : vector<1x256xi32>
    %c98_i32 = arith.constant 98 : i32
    %57 = vector.broadcast %c98_i32 : i32 to vector<1x256xi32>
    %58 = arith.cmpi slt, %1, %57 : vector<1x256xi32>
    %59 = arith.andi %56, %58 : vector<1x256xi1>
    %cst_28 = arith.constant 0.000000e+00 : f32
    %60 = vector.shape_cast %59 : vector<1x256xi1> to vector<1x256xi1>
    %61 = vector.broadcast %60 : vector<1x256xi1> to vector<16x256xi1>
    %62 = vector.broadcast %cst_28 : f32 to vector<16x256xf32>
    %63 = arith.select %61, %54, %62 : vector<16x256xi1>, vector<16x256xf32>
    %c254_i32 = arith.constant 254 : i32
    %64 = tpu.dynamic_rotate %52 by %c254_i32 dim 1 : vector<16x256xf32>, i32 -> vector<16x256xf32>
    %c-2_i32 = arith.constant -2 : i32
    %65 = vector.broadcast %c-2_i32 : i32 to vector<1x256xi32>
    %66 = arith.cmpi sge, %1, %65 : vector<1x256xi32>
    %c94_i32 = arith.constant 94 : i32
    %67 = vector.broadcast %c94_i32 : i32 to vector<1x256xi32>
    %68 = arith.cmpi slt, %1, %67 : vector<1x256xi32>
    %69 = arith.andi %66, %68 : vector<1x256xi1>
    %cst_29 = arith.constant 0.000000e+00 : f32
    %70 = vector.shape_cast %69 : vector<1x256xi1> to vector<1x256xi1>
    %71 = vector.broadcast %70 : vector<1x256xi1> to vector<16x256xi1>
    %72 = vector.broadcast %cst_29 : f32 to vector<16x256xf32>
    %73 = arith.select %71, %64, %72 : vector<16x256xi1>, vector<16x256xf32>
    %74 = tpu.concatenate %63, %52, %73 in 0 : vector<16x256xf32>, vector<16x256xf32>, vector<16x256xf32> -> vector<48x256xf32>
    %c1 = arith.constant 1 : index
    %c0_30 = arith.constant 0 : index
    %c0_31 = arith.constant 0 : index
    %75 = vector.load %arg5[%c1, %c0_30, %c0_31] : memref<3x32x48xf32, #tpu.memory_space<vmem>>, vector<1x32x48xf32>
    %76 = vector.shape_cast %75 : vector<1x32x48xf32> to vector<32x48xf32>
    %cst_32 = arith.constant dense<0.000000e+00> : vector<32x256xf32>
    %77 = tpu.matmul %76, %74, %cst_32 {dimension_numbers = #tpu.dot_dimension_numbers<[1], [0], [0], [1], [0, 0, 1, 1], [], []>} : vector<32x48xf32>, vector<48x256xf32>, vector<32x256xf32> -> vector<32x256xf32>
    %c1_33 = arith.constant 1 : index
    %c0_34 = arith.constant 0 : index
    %c0_35 = arith.constant 0 : index
    %78 = vector.load %arg6[%c1_33, %c0_34, %c0_35] : memref<3x32x1xf32, #tpu.memory_space<vmem>>, vector<1x32x1xf32>
    %79 = vector.shape_cast %78 : vector<1x32x1xf32> to vector<32x1xf32>
    %80 = vector.broadcast %79 : vector<32x1xf32> to vector<32x256xf32>
    %81 = arith.addf %77, %80 : vector<32x256xf32>
    %82 = vector.extract_strided_slice %81 {offsets = [0, 0], sizes = [16, 256], strides = [1, 1]} : vector<32x256xf32> to vector<16x256xf32>
    %83 = math.tanh %82 : vector<16x256xf32>
    %84 = vector.extract_strided_slice %81 {offsets = [16, 0], sizes = [16, 256], strides = [1, 1]} : vector<32x256xf32> to vector<16x256xf32>
    %cst_36 = arith.constant 0.000000e+00 : f32
    %85 = vector.broadcast %cst_36 : f32 to vector<16x256xf32>
    %86 = arith.subf %85, %84 : vector<16x256xf32>
    %87 = math.exp %86 : vector<16x256xf32>
    %cst_37 = arith.constant 1.000000e+00 : f32
    %88 = vector.broadcast %cst_37 : f32 to vector<16x256xf32>
    %89 = arith.addf %88, %87 : vector<16x256xf32>
    %cst_38 = arith.constant 1.000000e+00 : f32
    %90 = vector.broadcast %cst_38 : f32 to vector<16x256xf32>
    %91 = arith.divf %90, %89 : vector<16x256xf32>
    %92 = arith.mulf %83, %91 : vector<16x256xf32>
    %c1_39 = arith.constant 1 : index
    %c0_40 = arith.constant 0 : index
    %c0_41 = arith.constant 0 : index
    %93 = vector.load %arg7[%c1_39, %c0_40, %c0_41] : memref<3x16x16xf32, #tpu.memory_space<vmem>>, vector<1x16x16xf32>
    %94 = vector.shape_cast %93 : vector<1x16x16xf32> to vector<16x16xf32>
    %cst_42 = arith.constant dense<0.000000e+00> : vector<16x256xf32>
    %95 = tpu.matmul %94, %92, %cst_42 {dimension_numbers = #tpu.dot_dimension_numbers<[1], [0], [0], [1], [0, 0, 1, 1], [], []>} : vector<16x16xf32>, vector<16x256xf32>, vector<16x256xf32> -> vector<16x256xf32>
    %c1_43 = arith.constant 1 : index
    %c0_44 = arith.constant 0 : index
    %c0_45 = arith.constant 0 : index
    %96 = vector.load %arg8[%c1_43, %c0_44, %c0_45] : memref<3x16x1xf32, #tpu.memory_space<vmem>>, vector<1x16x1xf32>
    %97 = vector.shape_cast %96 : vector<1x16x1xf32> to vector<16x1xf32>
    %98 = vector.broadcast %97 : vector<16x1xf32> to vector<16x256xf32>
    %99 = arith.addf %95, %98 : vector<16x256xf32>
    %100 = arith.addf %53, %99 : vector<16x256xf32>
    %c4_i32 = arith.constant 4 : i32
    %101 = tpu.dynamic_rotate %99 by %c4_i32 dim 1 : vector<16x256xf32>, i32 -> vector<16x256xf32>
    %c4_i32_46 = arith.constant 4 : i32
    %102 = vector.broadcast %c4_i32_46 : i32 to vector<1x256xi32>
    %103 = arith.cmpi sge, %1, %102 : vector<1x256xi32>
    %c100_i32 = arith.constant 100 : i32
    %104 = vector.broadcast %c100_i32 : i32 to vector<1x256xi32>
    %105 = arith.cmpi slt, %1, %104 : vector<1x256xi32>
    %106 = arith.andi %103, %105 : vector<1x256xi1>
    %cst_47 = arith.constant 0.000000e+00 : f32
    %107 = vector.shape_cast %106 : vector<1x256xi1> to vector<1x256xi1>
    %108 = vector.broadcast %107 : vector<1x256xi1> to vector<16x256xi1>
    %109 = vector.broadcast %cst_47 : f32 to vector<16x256xf32>
    %110 = arith.select %108, %101, %109 : vector<16x256xi1>, vector<16x256xf32>
    %c252_i32 = arith.constant 252 : i32
    %111 = tpu.dynamic_rotate %99 by %c252_i32 dim 1 : vector<16x256xf32>, i32 -> vector<16x256xf32>
    %c-4_i32 = arith.constant -4 : i32
    %112 = vector.broadcast %c-4_i32 : i32 to vector<1x256xi32>
    %113 = arith.cmpi sge, %1, %112 : vector<1x256xi32>
    %c92_i32 = arith.constant 92 : i32
    %114 = vector.broadcast %c92_i32 : i32 to vector<1x256xi32>
    %115 = arith.cmpi slt, %1, %114 : vector<1x256xi32>
    %116 = arith.andi %113, %115 : vector<1x256xi1>
    %cst_48 = arith.constant 0.000000e+00 : f32
    %117 = vector.shape_cast %116 : vector<1x256xi1> to vector<1x256xi1>
    %118 = vector.broadcast %117 : vector<1x256xi1> to vector<16x256xi1>
    %119 = vector.broadcast %cst_48 : f32 to vector<16x256xf32>
    %120 = arith.select %118, %111, %119 : vector<16x256xi1>, vector<16x256xf32>
    %121 = tpu.concatenate %110, %99, %120 in 0 : vector<16x256xf32>, vector<16x256xf32>, vector<16x256xf32> -> vector<48x256xf32>
    %c2 = arith.constant 2 : index
    %c0_49 = arith.constant 0 : index
    %c0_50 = arith.constant 0 : index
    %122 = vector.load %arg5[%c2, %c0_49, %c0_50] : memref<3x32x48xf32, #tpu.memory_space<vmem>>, vector<1x32x48xf32>
    %123 = vector.shape_cast %122 : vector<1x32x48xf32> to vector<32x48xf32>
    %cst_51 = arith.constant dense<0.000000e+00> : vector<32x256xf32>
    %124 = tpu.matmul %123, %121, %cst_51 {dimension_numbers = #tpu.dot_dimension_numbers<[1], [0], [0], [1], [0, 0, 1, 1], [], []>} : vector<32x48xf32>, vector<48x256xf32>, vector<32x256xf32> -> vector<32x256xf32>
    %c2_52 = arith.constant 2 : index
    %c0_53 = arith.constant 0 : index
    %c0_54 = arith.constant 0 : index
    %125 = vector.load %arg6[%c2_52, %c0_53, %c0_54] : memref<3x32x1xf32, #tpu.memory_space<vmem>>, vector<1x32x1xf32>
    %126 = vector.shape_cast %125 : vector<1x32x1xf32> to vector<32x1xf32>
    %127 = vector.broadcast %126 : vector<32x1xf32> to vector<32x256xf32>
    %128 = arith.addf %124, %127 : vector<32x256xf32>
    %129 = vector.extract_strided_slice %128 {offsets = [0, 0], sizes = [16, 256], strides = [1, 1]} : vector<32x256xf32> to vector<16x256xf32>
    %130 = math.tanh %129 : vector<16x256xf32>
    %131 = vector.extract_strided_slice %128 {offsets = [16, 0], sizes = [16, 256], strides = [1, 1]} : vector<32x256xf32> to vector<16x256xf32>
    %cst_55 = arith.constant 0.000000e+00 : f32
    %132 = vector.broadcast %cst_55 : f32 to vector<16x256xf32>
    %133 = arith.subf %132, %131 : vector<16x256xf32>
    %134 = math.exp %133 : vector<16x256xf32>
    %cst_56 = arith.constant 1.000000e+00 : f32
    %135 = vector.broadcast %cst_56 : f32 to vector<16x256xf32>
    %136 = arith.addf %135, %134 : vector<16x256xf32>
    %cst_57 = arith.constant 1.000000e+00 : f32
    %137 = vector.broadcast %cst_57 : f32 to vector<16x256xf32>
    %138 = arith.divf %137, %136 : vector<16x256xf32>
    %139 = arith.mulf %130, %138 : vector<16x256xf32>
    %c2_58 = arith.constant 2 : index
    %c0_59 = arith.constant 0 : index
    %c0_60 = arith.constant 0 : index
    %140 = vector.load %arg7[%c2_58, %c0_59, %c0_60] : memref<3x16x16xf32, #tpu.memory_space<vmem>>, vector<1x16x16xf32>
    %141 = vector.shape_cast %140 : vector<1x16x16xf32> to vector<16x16xf32>
    %cst_61 = arith.constant dense<0.000000e+00> : vector<16x256xf32>
    %142 = tpu.matmul %141, %139, %cst_61 {dimension_numbers = #tpu.dot_dimension_numbers<[1], [0], [0], [1], [0, 0, 1, 1], [], []>} : vector<16x16xf32>, vector<16x256xf32>, vector<16x256xf32> -> vector<16x256xf32>
    %c2_62 = arith.constant 2 : index
    %c0_63 = arith.constant 0 : index
    %c0_64 = arith.constant 0 : index
    %143 = vector.load %arg8[%c2_62, %c0_63, %c0_64] : memref<3x16x1xf32, #tpu.memory_space<vmem>>, vector<1x16x1xf32>
    %144 = vector.shape_cast %143 : vector<1x16x1xf32> to vector<16x1xf32>
    %145 = vector.broadcast %144 : vector<16x1xf32> to vector<16x256xf32>
    %146 = arith.addf %142, %145 : vector<16x256xf32>
    %147 = arith.addf %100, %146 : vector<16x256xf32>
    %c0_65 = arith.constant 0 : index
    %c0_66 = arith.constant 0 : index
    %148 = vector.load %arg9[%c0_65, %c0_66] : memref<16x256xf32, #tpu.memory_space<vmem>>, vector<16x256xf32>
    tpu.vector_store %arg9[%c0_65, %c0_66], %147 {strides = array<i32>} : memref<16x256xf32, #tpu.memory_space<vmem>>, vector<16x256xf32>,
    return
  }
  func.func @transform_0(%arg0: i32) -> (i32, i32) {
    %c0_i32 = arith.constant 0 : i32
    %c0_i32_0 = arith.constant 0 : i32
    return %c0_i32, %arg0 : i32, i32
  }
  func.func @transform_1(%arg0: i32) -> (i32, i32) {
    %c0_i32 = arith.constant 0 : i32
    %c0_i32_0 = arith.constant 0 : i32
    return %c0_i32, %arg0 : i32, i32
  }
  func.func @transform_2(%arg0: i32) -> (i32, i32) {
    %c0_i32 = arith.constant 0 : i32
    %c0_i32_0 = arith.constant 0 : i32
    %c0_i32_1 = arith.constant 0 : i32
    return %c0_i32, %c0_i32_0 : i32, i32
  }
  func.func @transform_3(%arg0: i32) -> (i32, i32) {
    %c0_i32 = arith.constant 0 : i32
    %c0_i32_0 = arith.constant 0 : i32
    %c0_i32_1 = arith.constant 0 : i32
    return %c0_i32, %c0_i32_0 : i32, i32
  }
  func.func @transform_4(%arg0: i32) -> (i32, i32, i32) {
    %c0_i32 = arith.constant 0 : i32
    %c0_i32_0 = arith.constant 0 : i32
    %c0_i32_1 = arith.constant 0 : i32
    %c0_i32_2 = arith.constant 0 : i32
    return %c0_i32, %c0_i32_0, %c0_i32_1 : i32, i32, i32
  }
  func.func @transform_5(%arg0: i32) -> (i32, i32, i32) {
    %c0_i32 = arith.constant 0 : i32
    %c0_i32_0 = arith.constant 0 : i32
    %c0_i32_1 = arith.constant 0 : i32
    %c0_i32_2 = arith.constant 0 : i32
    return %c0_i32, %c0_i32_0, %c0_i32_1 : i32, i32, i32
  }
  func.func @transform_6(%arg0: i32) -> (i32, i32, i32) {
    %c0_i32 = arith.constant 0 : i32
    %c0_i32_0 = arith.constant 0 : i32
    %c0_i32_1 = arith.constant 0 : i32
    %c0_i32_2 = arith.constant 0 : i32
    return %c0_i32, %c0_i32_0, %c0_i32_1 : i32, i32, i32
  }
  func.func @transform_7(%arg0: i32) -> (i32, i32, i32) {
    %c0_i32 = arith.constant 0 : i32
    %c0_i32_0 = arith.constant 0 : i32
    %c0_i32_1 = arith.constant 0 : i32
    %c0_i32_2 = arith.constant 0 : i32
    return %c0_i32, %c0_i32_0, %c0_i32_1 : i32, i32, i32
  }
  func.func @transform_8(%arg0: i32) -> (i32, i32) {
    %c0_i32 = arith.constant 0 : i32
    %c0_i32_0 = arith.constant 0 : i32
    return %c0_i32, %arg0 : i32, i32
  }
}

</mosaic_0001>

<llo_original>
// kernel: tpu_custom_call.1
$region0: #{tpu_custom_call.1}
  #allocation0 [shape = 'u32[]', space=smem, size = 0x4, offset = 0x4, fixed_abs, tag = 'smem constant byte address 0x4 - core index']
  #allocation1 [shape = 'u32[144,128]{1,0:T(1,128)}', space=vmem, size = 0x12000, scoped, tag = 'internal scratch']
  %s0 = inlined_call_operand.vmem [shape: f32[4,256], index: 0, kind: input, shape index: {}]
  %s1 = inlined_call_operand.vmem [shape: s32[1,256], index: 1, kind: input, shape index: {}]
  %s2 = inlined_call_operand.vmem [shape: f32[16,4], index: 2, kind: input, shape index: {}]
  %s3 = inlined_call_operand.vmem [shape: f32[16,1], index: 3, kind: input, shape index: {}]
  %s4 = inlined_call_operand.vmem [shape: f32[3,32,48], index: 4, kind: input, shape index: {}]
  %s5 = inlined_call_operand.vmem [shape: f32[3,32,1], index: 5, kind: input, shape index: {}]
  %s6 = inlined_call_operand.vmem [shape: f32[3,16,16], index: 6, kind: input, shape index: {}]
  %s7 = inlined_call_operand.vmem [shape: f32[3,16,1], index: 7, kind: input, shape index: {}]
  %s8 = inlined_call_operand.hbm [shape: f32[16,256], index: 8, kind: output, shape index: {}]
  %s9 = sld [smem:[#allocation0]]
  $region42: #{tpu_custom_call.1} parent=0
    _
  %s11 = ssub.s32 1, %s9
  %s12 = scalar_select 0, %s11, %s9
  $region1: #{tpu_custom_call.1} parent=0
    #allocation2 [shape = 'u8[16384]{0}', space=vmem, size = 0x4000, scoped, tag = 'output window, operand 0, single buffered']
    #allocation3 [shape = 's32[1]{0}', space=sflag, size = 0x4, scoped, tag = 'scoped memory for tpu_custom_call.1']
    %13 = vsyncpa [#allocation3], 0
    // Predicated region
    $region2: #{tpu_custom_call.1} parent=1 // pred_check
      _
    $region3: #{tpu_custom_call.1} parent=1 // pred_check_branch
      %15 = sbr.rel (0) target = $region5
    $region4: #{tpu_custom_call.1} parent=1 // pred_region
      _
    $region5: #{tpu_custom_call.1} parent=1 // pred_fallthru
      _
    // Predicated region
    $region6: #{tpu_custom_call.1} parent=1 // pred_check
      _
    $region7: #{tpu_custom_call.1} parent=1 // pred_check_branch
      %17 = sbr.rel (0) target = $region9
    $region8: #{tpu_custom_call.1} parent=1 // pred_region
      _
    $region9: #{tpu_custom_call.1} parent=1 // pred_fallthru
      _
    // Predicated region
    $region10: #{tpu_custom_call.1} parent=1 // pred_check
      _
    $region11: #{tpu_custom_call.1} parent=1 // pred_check_branch
      %19 = sbr.rel (0) target = $region13
    $region12: #{tpu_custom_call.1} parent=1 // pred_region
      _
    $region13: #{tpu_custom_call.1} parent=1 // pred_fallthru
      _
    // Predicated region
    $region14: #{tpu_custom_call.1} parent=1 // pred_check
      _
    $region15: #{tpu_custom_call.1} parent=1 // pred_check_branch
      %21 = sbr.rel (0) target = $region17
    $region16: #{tpu_custom_call.1} parent=1 // pred_region
      _
    $region17: #{tpu_custom_call.1} parent=1 // pred_fallthru
      _
    // Predicated region
    $region18: #{tpu_custom_call.1} parent=1 // pred_check
      _
    $region19: #{tpu_custom_call.1} parent=1 // pred_check_branch
      %23 = sbr.rel (0) target = $region21
    $region20: #{tpu_custom_call.1} parent=1 // pred_region
      _
    $region21: #{tpu_custom_call.1} parent=1 // pred_fallthru
      _
    // Predicated region
    $region22: #{tpu_custom_call.1} parent=1 // pred_check
      _
    $region23: #{tpu_custom_call.1} parent=1 // pred_check_branch
      %25 = sbr.rel (0) target = $region25
    $region24: #{tpu_custom_call.1} parent=1 // pred_region
      _
    $region25: #{tpu_custom_call.1} parent=1 // pred_fallthru
      _
    // Predicated region
    $region26: #{tpu_custom_call.1} parent=1 // pred_check
      _
    $region27: #{tpu_custom_call.1} parent=1 // pred_check_branch
      %27 = sbr.rel (0) target = $region29
    $region28: #{tpu_custom_call.1} parent=1 // pred_region
      _
    $region29: #{tpu_custom_call.1} parent=1 // pred_fallthru
      _
    // Predicated region
    $region30: #{tpu_custom_call.1} parent=1 // pred_check
      _
    $region31: #{tpu_custom_call.1} parent=1 // pred_check_branch
      %29 = sbr.rel (0) target = $region33
    $region32: #{tpu_custom_call.1} parent=1 // pred_region
      _
    $region33: #{tpu_custom_call.1} parent=1 // pred_fallthru
      _
    %v30 = vld [vmem:[%s0] sm:$0xff]
    %v31 = vld [vmem:[%s1] sm:$0x3]
    %v32 = vld [vmem:[%s2] sm:$0xff]
    %v33 = vld [vmem:[%s2 + $0x8] sm:$0xff]
    %v34 = vld [vmem:[%s3] sm:$0xff]
    %v35 = vld [vmem:[%s3 + $0x8] sm:$0xff]
    %37 = vset.pattern.permute.xlu0 0
    %38 = vperm.xlu0 %37, %v34
    %v39 = vpop.permute.xlu0 %38
    %42 = vset.pattern.permute.xlu0 0
    %43 = vperm.xlu0 %42, %v35
    %v44 = vpop.permute.xlu0 %43
    %v47 = vcombine.high %v30, %v30
    %vm48 = vcmask 31744
    %v50 = vsel %vm48, %v32, 0
    %v53 = vsel %vm48, %v33, 0
    %vm55 = vcmask 1043456
    %v56 = vsel %vm55, %v30, 0
    %v58 = vsel %vm55, %v47, 0
    %60 = vmatprep.subr.mxu0 %v58
    %61 = vmatpush1.msra.mxu0 %v56
    %62 = vmatprep.subr.mxu0 0.0
    %63 = vmatpush1.msra.mxu0 0.0
    %64 = vmatprep.subr.mxu0 0.0
    %65 = vmatpush1.msra.mxu0 0.0
    %66 = vmatprep.subr.mxu0 0.0
    %67 = vmatpush1.msra.mxu0 0.0
    %68 = vmatprep.subr.mxu0 0.0
    %69 = vmatpush1.msra.mxu0 0.0
    %70 = vmatprep.subr.mxu0 0.0
    %71 = vmatpush1.msra.mxu0 0.0
    %72 = vmatprep.subr.mxu0 0.0
    %73 = vmatpush1.msra.mxu0 0.0
    %74 = vmatprep.subr.mxu0 0.0
    %75 = vmatpush1.msra.mxu0 0.0
    %76 = vmatprep.subr.mxu0 0.0
    %77 = vmatpush1.msra.mxu0 0.0
    %78 = vmatprep.subr.mxu0 0.0
    %79 = vmatpush1.msra.mxu0 0.0
    %80 = vmatprep.subr.mxu0 0.0
    %81 = vmatpush1.msra.mxu0 0.0
    %82 = vmatprep.subr.mxu0 0.0
    %83 = vmatpush1.msra.mxu0 0.0
    %84 = vmatprep.subr.mxu0 0.0
    %85 = vmatpush1.msra.mxu0 0.0
    %86 = vmatprep.subr.mxu0 0.0
    %87 = vmatpush1.msra.mxu0 0.0
    %88 = vmatprep.subr.mxu0 0.0
    %89 = vmatpush1.msra.mxu0 0.0
    %90 = vmatprep.subr.mxu0 0.0
    %91 = vmatpush1.msra.mxu0 0.0
    %92 = vmatprep.subr.mxu0 0.0
    %93 = vmatpush1.msra.mxu0 0.0
    %94 = vmatprep.subr.mxu0 0.0
    %95 = vmatpush1.msra.mxu0 0.0
    %96 = vmatprep.subr.mxu0 0.0
    %97 = vmatpush1.msra.mxu0 0.0
    %98 = vmatprep.subr.mxu0 0.0
    %99 = vmatpush1.msra.mxu0 0.0
    %100 = vmatprep.subr.mxu0 0.0
    %101 = vmatpush1.msra.mxu0 0.0
    %102 = vmatprep.subr.mxu0 0.0
    %103 = vmatpush1.msra.mxu0 0.0
    %104 = vmatprep.subr.mxu0 0.0
    %105 = vmatpush1.msra.mxu0 0.0
    %106 = vmatprep.subr.mxu0 0.0
    %107 = vmatpush1.msra.mxu0 0.0
    %108 = vmatprep.subr.mxu0 0.0
    %109 = vmatpush1.msra.mxu0 0.0
    %110 = vmatprep.subr.mxu0 0.0
    %111 = vmatpush1.msra.mxu0 0.0
    %112 = vmatprep.subr.mxu0 0.0
    %113 = vmatpush1.msra.mxu0 0.0
    %114 = vmatprep.subr.mxu0 0.0
    %115 = vmatpush1.msra.mxu0 0.0
    %116 = vmatprep.subr.mxu0 0.0
    %117 = vmatpush1.msra.mxu0 0.0
    %118 = vmatprep.subr.mxu0 0.0
    %119 = vmatpush1.msra.mxu0 0.0
    %120 = vmatprep.subr.mxu0 0.0
    %121 = vmatpush1.msra.mxu0 0.0
    %122 = vmatprep.subr.mxu0 0.0
    %123 = vmatpush1.msra.mxu0 0.0
    %124 = vmatprep.mubr.f32.mxu0 0.0
    %125 = vmatmul.mubr.f32.gmra.mrb[0].mxu0 %v50
    %v126 = vpop.f32.mrb[0].mxu0
    %v127 = vadd.f32 %v39, %v126
    %v128 = vpop.f32.mrb[0].mxu0
    %v129 = vadd.f32 %v39, %v128
    %130 = vmatprep.mubr.f32.mxu0 0.0
    %131 = vmatmul.mubr.f32.gmra.mrb[0].mxu0 %v53
    %v132 = vpop.f32.mrb[0].mxu0
    %v133 = vadd.f32 %v44, %v132
    %v134 = vpop.f32.mrb[0].mxu0
    %v135 = vadd.f32 %v44, %v134
    %136 = vdwg.mxu0
    %137 = vrot.lane.b32.xlu0 %v127, 1
    %v138 = vpop.permute.xlu0 %137
    %139 = vrot.lane.b32.xlu0 %v133, 1
    %v140 = vpop.permute.xlu0 %139
    %141 = vrot.lane.b32.xlu0 %v129, 1
    %v142 = vpop.permute.xlu0 %141
    %143 = vrot.lane.b32.xlu0 %v135, 1
    %v144 = vpop.permute.xlu0 %143
    %v145 = vlaneseq
    %v146 = vand.u32 %v145, 127
    %vm147 = vcmp.lt.s32.totalorder %v146, 1
    %v148 = vsel %vm147, %v138, %v142
    %v149 = vsel %vm147, %v140, %v144
    %v150 = vsel %vm147, %v142, %v138
    %v151 = vsel %vm147, %v144, %v140
    %vm152 = vcmp.ge.s32.totalorder %v31, 1
    %vm153 = vcmp.lt.s32.totalorder %v31, 97
    %vm154 = vmand %vm152, %vm153
    %v155 = vsel %vm154, 1, 0
    %v156 = vlaneseq
    %v157 = vshrl.u32 %v156, 7
    %v158 = vsub.s32 0, %v157
    %v159 = vrot.slane %v155, %v158
    %v160 = vlaneseq
    %v161 = vshrl.u32 %v160, 7
    %v162 = vsub.s32 1, %v161
    %v163 = vrot.slane %v155, %v162
    %vm164 = vcmp.eq.s32.totalorder %v159, 1
    %vm165 = vcmp.eq.s32.totalorder %v163, 1
    %v166 = vsel %vm164, %v150, 0.0
    %v167 = vsel %vm165, %v148, 0.0
    %v168 = vsel %vm164, %v151, 0.0
    %v169 = vsel %vm165, %v149, 0.0
    %170 = vrot.lane.b32.xlu0 %v127, 127
    %v171 = vpop.permute.xlu0 %170
    %172 = vrot.lane.b32.xlu0 %v133, 127
    %v173 = vpop.permute.xlu0 %172
    %174 = vrot.lane.b32.xlu0 %v129, 127
    %v175 = vpop.permute.xlu0 %174
    %176 = vrot.lane.b32.xlu0 %v135, 127
    %v177 = vpop.permute.xlu0 %176
    %vm178 = vcmp.lt.s32.totalorder %v146, 127
    %v179 = vsel %vm178, %v171, %v175
    %v180 = vsel %vm178, %v173, %v177
    %v181 = vsel %vm178, %v175, %v171
    %v182 = vsel %vm178, %v177, %v173
    %vm183 = vcmp.ge.s32.totalorder %v31, 4294967295
    %vm184 = vcmp.lt.s32.totalorder %v31, 95
    %vm185 = vmand %vm183, %vm184
    %v186 = vsel %vm185, 1, 0
    %v187 = vlaneseq
    %v188 = vshrl.u32 %v187, 7
    %v189 = vsub.s32 0, %v188
    %v190 = vrot.slane %v186, %v189
    %v191 = vlaneseq
    %v192 = vshrl.u32 %v191, 7
    %v193 = vsub.s32 1, %v192
    %v194 = vrot.slane %v186, %v193
    %vm195 = vcmp.eq.s32.totalorder %v190, 1
    %vm196 = vcmp.eq.s32.totalorder %v194, 1
    %v197 = vsel %vm195, %v179, 0.0
    %v198 = vsel %vm196, %v181, 0.0
    %v199 = vsel %vm195, %v180, 0.0
    %v200 = vsel %vm196, %v182, 0.0
    %v201 = vld [vmem:[%s4] sm:$0xff]
    %v202 = vld [vmem:[%s4 + $0x8] sm:$0xff]
    %v203 = vld [vmem:[%s4 + $0x10] sm:$0xff]
    %v204 = vld [vmem:[%s4 + $0x18] sm:$0xff]
    %v205 = vld [vmem:[%s5] sm:$0xff]
    %v206 = vld [vmem:[%s5 + $0x8] sm:$0xff]
    %v207 = vld [vmem:[%s5 + $0x10] sm:$0xff]
    %v208 = vld [vmem:[%s5 + $0x18] sm:$0xff]
    %210 = vset.pattern.permute.xlu0 0
    %211 = vperm.xlu0 %210, %v205
    %v212 = vpop.permute.xlu0 %211
    %215 = vset.pattern.permute.xlu0 0
    %216 = vperm.xlu0 %215, %v206
    %v217 = vpop.permute.xlu0 %216
    %220 = vset.pattern.permute.xlu0 0
    %221 = vperm.xlu0 %220, %v207
    %v222 = vpop.permute.xlu0 %221
    %225 = vset.pattern.permute.xlu0 0
    %226 = vperm.xlu0 %225, %v208
    %v227 = vpop.permute.xlu0 %226
    %vm229 = vcmask 392192
    %v231 = vsel %vm229, %v201, 0
    %v234 = vsel %vm229, %v202, 0
    %v237 = vsel %vm229, %v203, 0
    %v240 = vsel %vm229, %v204, 0
    %242 = vmatprep.subr.mxu0 %v167
    %243 = vmatpush1.msra.mxu0 %v166
    %244 = vmatprep.subr.mxu0 %v169
    %245 = vmatpush1.msra.mxu0 %v168
    %246 = vmatprep.subr.mxu0 %v129
    %247 = vmatpush1.msra.mxu0 %v127
    %248 = vmatprep.subr.mxu0 %v135
    %249 = vmatpush1.msra.mxu0 %v133
    %250 = vmatprep.subr.mxu0 %v198
    %251 = vmatpush1.msra.mxu0 %v197
    %252 = vmatprep.subr.mxu0 %v200
    %253 = vmatpush1.msra.mxu0 %v199
    %254 = vmatprep.subr.mxu0 0.0
    %255 = vmatpush1.msra.mxu0 0.0
    %256 = vmatprep.subr.mxu0 0.0
    %257 = vmatpush1.msra.mxu0 0.0
    %258 = vmatprep.subr.mxu0 0.0
    %259 = vmatpush1.msra.mxu0 0.0
    %260 = vmatprep.subr.mxu0 0.0
    %261 = vmatpush1.msra.mxu0 0.0
    %262 = vmatprep.subr.mxu0 0.0
    %263 = vmatpush1.msra.mxu0 0.0
    %264 = vmatprep.subr.mxu0 0.0
    %265 = vmatpush1.msra.mxu0 0.0
    %266 = vmatprep.subr.mxu0 0.0
    %267 = vmatpush1.msra.mxu0 0.0
    %268 = vmatprep.subr.mxu0 0.0
    %269 = vmatpush1.msra.mxu0 0.0
    %270 = vmatprep.subr.mxu0 0.0
    %271 = vmatpush1.msra.mxu0 0.0
    %272 = vmatprep.subr.mxu0 0.0
    %273 = vmatpush1.msra.mxu0 0.0
    %274 = vmatprep.subr.mxu0 0.0
    %275 = vmatpush1.msra.mxu0 0.0
    %276 = vmatprep.subr.mxu0 0.0
    %277 = vmatpush1.msra.mxu0 0.0
    %278 = vmatprep.subr.mxu0 0.0
    %279 = vmatpush1.msra.mxu0 0.0
    %280 = vmatprep.subr.mxu0 0.0
    %281 = vmatpush1.msra.mxu0 0.0
    %282 = vmatprep.subr.mxu0 0.0
    %283 = vmatpush1.msra.mxu0 0.0
    %284 = vmatprep.subr.mxu0 0.0
    %285 = vmatpush1.msra.mxu0 0.0
    %286 = vmatprep.subr.mxu0 0.0
    %287 = vmatpush1.msra.mxu0 0.0
    %288 = vmatprep.subr.mxu0 0.0
    %289 = vmatpush1.msra.mxu0 0.0
    %290 = vmatprep.subr.mxu0 0.0
    %291 = vmatpush1.msra.mxu0 0.0
    %292 = vmatprep.subr.mxu0 0.0
    %293 = vmatpush1.msra.mxu0 0.0
    %294 = vmatprep.subr.mxu0 0.0
    %295 = vmatpush1.msra.mxu0 0.0
    %296 = vmatprep.subr.mxu0 0.0
    %297 = vmatpush1.msra.mxu0 0.0
    %298 = vmatprep.subr.mxu0 0.0
    %299 = vmatpush1.msra.mxu0 0.0
    %300 = vmatprep.subr.mxu0 0.0
    %301 = vmatpush1.msra.mxu0 0.0
    %302 = vmatprep.subr.mxu0 0.0
    %303 = vmatpush1.msra.mxu0 0.0
    %304 = vmatprep.subr.mxu0 0.0
    %305 = vmatpush1.msra.mxu0 0.0
    %306 = vmatprep.mubr.f32.mxu0 0.0
    %307 = vmatmul.mubr.f32.gmra.mrb[0].mxu0 %v231
    %v308 = vpop.f32.mrb[0].mxu0
    %v309 = vadd.f32 %v212, %v308
    %v310 = vpop.f32.mrb[0].mxu0
    %v311 = vadd.f32 %v212, %v310
    %312 = vmatprep.mubr.f32.mxu0 0.0
    %313 = vmatmul.mubr.f32.gmra.mrb[0].mxu0 %v234
    %v314 = vpop.f32.mrb[0].mxu0
    %v315 = vadd.f32 %v217, %v314
    %v316 = vpop.f32.mrb[0].mxu0
    %v317 = vadd.f32 %v217, %v316
    %318 = vmatprep.mubr.f32.mxu0 0.0
    %319 = vmatmul.mubr.f32.gmra.mrb[0].mxu0 %v237
    %v320 = vpop.f32.mrb[0].mxu0
    %v321 = vadd.f32 %v222, %v320
    %v322 = vpop.f32.mrb[0].mxu0
    %v323 = vadd.f32 %v222, %v322
    %324 = vmatprep.mubr.f32.mxu0 0.0
    %325 = vmatmul.mubr.f32.gmra.mrb[0].mxu0 %v240
    %v326 = vpop.f32.mrb[0].mxu0
    %v327 = vadd.f32 %v227, %v326
    %v328 = vpop.f32.mrb[0].mxu0
    %v329 = vadd.f32 %v227, %v328
    %330 = vdwg.mxu0
    %v331 = vtanh.pop %v309
    %v332 = vtanh.pop %v311
    %v333 = vtanh.pop %v315
    %v334 = vtanh.pop %v317
    %v335 = vsub.f32 0.0, %v321
    %v336 = vsub.f32 0.0, %v323
    %v337 = vsub.f32 0.0, %v327
    %v338 = vsub.f32 0.0, %v329
    %v339 = vmul.f32 %v335, 1.442695
    %v340 = vpow.pop %v339
    %v341 = vmul.f32 %v336, 1.442695
    %v342 = vpow.pop %v341
    %v343 = vmul.f32 %v337, 1.442695
    %v344 = vpow.pop %v343
    %v345 = vmul.f32 %v338, 1.442695
    %v346 = vpow.pop %v345
    %v347 = vadd.f32 %v340, 1.0
    %v348 = vadd.f32 %v342, 1.0
    %v349 = vadd.f32 %v344, 1.0
    %v350 = vadd.f32 %v346, 1.0
    %v351 = vrcp.pop %v347
    %v352 = vmul.f32 1.0, %v351
    %v353 = vrcp.pop %v348
    %v354 = vmul.f32 1.0, %v353
    %v355 = vrcp.pop %v349
    %v356 = vmul.f32 1.0, %v355
    %v357 = vrcp.pop %v350
    %v358 = vmul.f32 1.0, %v357
    %v359 = vmul.f32 %v331, %v352
    %v360 = vmul.f32 %v332, %v354
    %v361 = vmul.f32 %v333, %v356
    %v362 = vmul.f32 %v334, %v358
    %v363 = vld [vmem:[%s6] sm:$0xff]
    %v364 = vld [vmem:[%s6 + $0x8] sm:$0xff]
    %v365 = vld [vmem:[%s7] sm:$0xff]
    %v366 = vld [vmem:[%s7 + $0x8] sm:$0xff]
    %368 = vset.pattern.permute.xlu0 0
    %369 = vperm.xlu0 %368, %v365
    %v370 = vpop.permute.xlu0 %369
    %373 = vset.pattern.permute.xlu0 0
    %374 = vperm.xlu0 %373, %v366
    %v375 = vpop.permute.xlu0 %374
    %vm377 = vcmask 130048
    %v379 = vsel %vm377, %v363, 0
    %v382 = vsel %vm377, %v364, 0
    %384 = vmatprep.subr.mxu0 %v360
    %385 = vmatpush1.msra.mxu0 %v359
    %386 = vmatprep.subr.mxu0 %v362
    %387 = vmatpush1.msra.mxu0 %v361
    %388 = vmatprep.subr.mxu0 0.0
    %389 = vmatpush1.msra.mxu0 0.0
    %390 = vmatprep.subr.mxu0 0.0
    %391 = vmatpush1.msra.mxu0 0.0
    %392 = vmatprep.subr.mxu0 0.0
    %393 = vmatpush1.msra.mxu0 0.0
    %394 = vmatprep.subr.mxu0 0.0
    %395 = vmatpush1.msra.mxu0 0.0
    %396 = vmatprep.subr.mxu0 0.0
    %397 = vmatpush1.msra.mxu0 0.0
    %398 = vmatprep.subr.mxu0 0.0
    %399 = vmatpush1.msra.mxu0 0.0
    %400 = vmatprep.subr.mxu0 0.0
    %401 = vmatpush1.msra.mxu0 0.0
    %402 = vmatprep.subr.mxu0 0.0
    %403 = vmatpush1.msra.mxu0 0.0
    %404 = vmatprep.subr.mxu0 0.0
    %405 = vmatpush1.msra.mxu0 0.0
    %406 = vmatprep.subr.mxu0 0.0
    %407 = vmatpush1.msra.mxu0 0.0
    %408 = vmatprep.subr.mxu0 0.0
    %409 = vmatpush1.msra.mxu0 0.0
    %410 = vmatprep.subr.mxu0 0.0
    %411 = vmatpush1.msra.mxu0 0.0
    %412 = vmatprep.subr.mxu0 0.0
    %413 = vmatpush1.msra.mxu0 0.0
    %414 = vmatprep.subr.mxu0 0.0
    %415 = vmatpush1.msra.mxu0 0.0
    %416 = vmatprep.subr.mxu0 0.0
    %417 = vmatpush1.msra.mxu0 0.0
    %418 = vmatprep.subr.mxu0 0.0
    %419 = vmatpush1.msra.mxu0 0.0
    %420 = vmatprep.subr.mxu0 0.0
    %421 = vmatpush1.msra.mxu0 0.0
    %422 = vmatprep.subr.mxu0 0.0
    %423 = vmatpush1.msra.mxu0 0.0
    %424 = vmatprep.subr.mxu0 0.0
    %425 = vmatpush1.msra.mxu0 0.0
    %426 = vmatprep.subr.mxu0 0.0
    %427 = vmatpush1.msra.mxu0 0.0
    %428 = vmatprep.subr.mxu0 0.0
    %429 = vmatpush1.msra.mxu0 0.0
    %430 = vmatprep.subr.mxu0 0.0
    %431 = vmatpush1.msra.mxu0 0.0
    %432 = vmatprep.subr.mxu0 0.0
    %433 = vmatpush1.msra.mxu0 0.0
    %434 = vmatprep.subr.mxu0 0.0
    %435 = vmatpush1.msra.mxu0 0.0
    %436 = vmatprep.subr.mxu0 0.0
    %437 = vmatpush1.msra.mxu0 0.0
    %438 = vmatprep.subr.mxu0 0.0
    %439 = vmatpush1.msra.mxu0 0.0
    %440 = vmatprep.subr.mxu0 0.0
    %441 = vmatpush1.msra.mxu0 0.0
    %442 = vmatprep.subr.mxu0 0.0
    %443 = vmatpush1.msra.mxu0 0.0
    %444 = vmatprep.subr.mxu0 0.0
    %445 = vmatpush1.msra.mxu0 0.0
    %446 = vmatprep.subr.mxu0 0.0
    %447 = vmatpush1.msra.mxu0 0.0
    %448 = vmatprep.mubr.f32.mxu0 0.0
    %449 = vmatmul.mubr.f32.gmra.mrb[0].mxu0 %v379
    %v450 = vpop.f32.mrb[0].mxu0
    %v451 = vadd.f32 %v370, %v450
    %v452 = vpop.f32.mrb[0].mxu0
    %v453 = vadd.f32 %v370, %v452
    %454 = vmatprep.mubr.f32.mxu0 0.0
    %455 = vmatmul.mubr.f32.gmra.mrb[0].mxu0 %v382
    %v456 = vpop.f32.mrb[0].mxu0
    %v457 = vadd.f32 %v375, %v456
    %v458 = vpop.f32.mrb[0].mxu0
    %v459 = vadd.f32 %v375, %v458
    %460 = vdwg.mxu0
    %v461 = vadd.f32 %v127, %v451
    %v462 = vadd.f32 %v129, %v453
    %v463 = vadd.f32 %v133, %v457
    %v464 = vadd.f32 %v135, %v459
    %465 = vrot.lane.b32.xlu0 %v451, 2
    %v466 = vpop.permute.xlu0 %465
    %467 = vrot.lane.b32.xlu0 %v457, 2
    %v468 = vpop.permute.xlu0 %467
    %469 = vrot.lane.b32.xlu0 %v453, 2
    %v470 = vpop.permute.xlu0 %469
    %471 = vrot.lane.b32.xlu0 %v459, 2
    %v472 = vpop.permute.xlu0 %471
    %vm473 = vcmp.lt.s32.totalorder %v146, 2
    %v474 = vsel %vm473, %v466, %v470
    %v475 = vsel %vm473, %v468, %v472
    %v476 = vsel %vm473, %v470, %v466
    %v477 = vsel %vm473, %v472, %v468
    %vm478 = vcmp.ge.s32.totalorder %v31, 2
    %vm479 = vcmp.lt.s32.totalorder %v31, 98
    %vm480 = vmand %vm478, %vm479
    %v481 = vsel %vm480, 1, 0
    %v482 = vlaneseq
    %v483 = vshrl.u32 %v482, 7
    %v484 = vsub.s32 0, %v483
    %v485 = vrot.slane %v481, %v484
    %v486 = vlaneseq
    %v487 = vshrl.u32 %v486, 7
    %v488 = vsub.s32 1, %v487
    %v489 = vrot.slane %v481, %v488
    %vm490 = vcmp.eq.s32.totalorder %v485, 1
    %vm491 = vcmp.eq.s32.totalorder %v489, 1
    %v492 = vsel %vm490, %v476, 0.0
    %v493 = vsel %vm491, %v474, 0.0
    %v494 = vsel %vm490, %v477, 0.0
    %v495 = vsel %vm491, %v475, 0.0
    %496 = vrot.lane.b32.xlu0 %v451, 126
    %v497 = vpop.permute.xlu0 %496
    %498 = vrot.lane.b32.xlu0 %v457, 126
    %v499 = vpop.permute.xlu0 %498
    %500 = vrot.lane.b32.xlu0 %v453, 126
    %v501 = vpop.permute.xlu0 %500
    %502 = vrot.lane.b32.xlu0 %v459, 126
    %v503 = vpop.permute.xlu0 %502
    %vm504 = vcmp.lt.s32.totalorder %v146, 126
    %v505 = vsel %vm504, %v497, %v501
    %v506 = vsel %vm504, %v499, %v503
    %v507 = vsel %vm504, %v501, %v497
    %v508 = vsel %vm504, %v503, %v499
    %vm509 = vcmp.ge.s32.totalorder %v31, 4294967294
    %vm510 = vcmp.lt.s32.totalorder %v31, 94
    %vm511 = vmand %vm509, %vm510
    %v512 = vsel %vm511, 1, 0
    %v513 = vlaneseq
    %v514 = vshrl.u32 %v513, 7
    %v515 = vsub.s32 0, %v514
    %v516 = vrot.slane %v512, %v515
    %v517 = vlaneseq
    %v518 = vshrl.u32 %v517, 7
    %v519 = vsub.s32 1, %v518
    %v520 = vrot.slane %v512, %v519
    %vm521 = vcmp.eq.s32.totalorder %v516, 1
    %vm522 = vcmp.eq.s32.totalorder %v520, 1
    %v523 = vsel %vm521, %v505, 0.0
    %v524 = vsel %vm522, %v507, 0.0
    %v525 = vsel %vm521, %v506, 0.0
    %v526 = vsel %vm522, %v508, 0.0
    %s527 = scalar_lea.vmem %s4, 32
    %v528 = vld [vmem:[%s527] sm:$0xff]
    %v529 = vld [vmem:[%s527 + $0x8] sm:$0xff]
    %v530 = vld [vmem:[%s527 + $0x10] sm:$0xff]
    %v531 = vld [vmem:[%s527 + $0x18] sm:$0xff]
    %s532 = scalar_lea.vmem %s5, 32
    %v533 = vld [vmem:[%s532] sm:$0xff]
    %v534 = vld [vmem:[%s532 + $0x8] sm:$0xff]
    %v535 = vld [vmem:[%s532 + $0x10] sm:$0xff]
    %v536 = vld [vmem:[%s532 + $0x18] sm:$0xff]
    %538 = vset.pattern.permute.xlu0 0
    %539 = vperm.xlu0 %538, %v533
    %v540 = vpop.permute.xlu0 %539
    %543 = vset.pattern.permute.xlu0 0
    %544 = vperm.xlu0 %543, %v534
    %v545 = vpop.permute.xlu0 %544
    %548 = vset.pattern.permute.xlu0 0
    %549 = vperm.xlu0 %548, %v535
    %v550 = vpop.permute.xlu0 %549
    %553 = vset.pattern.permute.xlu0 0
    %554 = vperm.xlu0 %553, %v536
    %v555 = vpop.permute.xlu0 %554
    %v558 = vsel %vm229, %v528, 0
    %v561 = vsel %vm229, %v529, 0
    %v564 = vsel %vm229, %v530, 0
    %v567 = vsel %vm229, %v531, 0
    %569 = vmatprep.subr.mxu0 %v493
    %570 = vmatpush1.msra.mxu0 %v492
    %571 = vmatprep.subr.mxu0 %v495
    %572 = vmatpush1.msra.mxu0 %v494
    %573 = vmatprep.subr.mxu0 %v453
    %574 = vmatpush1.msra.mxu0 %v451
    %575 = vmatprep.subr.mxu0 %v459
    %576 = vmatpush1.msra.mxu0 %v457
    %577 = vmatprep.subr.mxu0 %v524
    %578 = vmatpush1.msra.mxu0 %v523
    %579 = vmatprep.subr.mxu0 %v526
    %580 = vmatpush1.msra.mxu0 %v525
    %581 = vmatprep.subr.mxu0 0.0
    %582 = vmatpush1.msra.mxu0 0.0
    %583 = vmatprep.subr.mxu0 0.0
    %584 = vmatpush1.msra.mxu0 0.0
    %585 = vmatprep.subr.mxu0 0.0
    %586 = vmatpush1.msra.mxu0 0.0
    %587 = vmatprep.subr.mxu0 0.0
    %588 = vmatpush1.msra.mxu0 0.0
    %589 = vmatprep.subr.mxu0 0.0
    %590 = vmatpush1.msra.mxu0 0.0
    %591 = vmatprep.subr.mxu0 0.0
    %592 = vmatpush1.msra.mxu0 0.0
    %593 = vmatprep.subr.mxu0 0.0
    %594 = vmatpush1.msra.mxu0 0.0
    %595 = vmatprep.subr.mxu0 0.0
    %596 = vmatpush1.msra.mxu0 0.0
    %597 = vmatprep.subr.mxu0 0.0
    %598 = vmatpush1.msra.mxu0 0.0
    %599 = vmatprep.subr.mxu0 0.0
    %600 = vmatpush1.msra.mxu0 0.0
    %601 = vmatprep.subr.mxu0 0.0
    %602 = vmatpush1.msra.mxu0 0.0
    %603 = vmatprep.subr.mxu0 0.0
    %604 = vmatpush1.msra.mxu0 0.0
    %605 = vmatprep.subr.mxu0 0.0
    %606 = vmatpush1.msra.mxu0 0.0
    %607 = vmatprep.subr.mxu0 0.0
    %608 = vmatpush1.msra.mxu0 0.0
    %609 = vmatprep.subr.mxu0 0.0
    %610 = vmatpush1.msra.mxu0 0.0
    %611 = vmatprep.subr.mxu0 0.0
    %612 = vmatpush1.msra.mxu0 0.0
    %613 = vmatprep.subr.mxu0 0.0
    %614 = vmatpush1.msra.mxu0 0.0
    %615 = vmatprep.subr.mxu0 0.0
    %616 = vmatpush1.msra.mxu0 0.0
    %617 = vmatprep.subr.mxu0 0.0
    %618 = vmatpush1.msra.mxu0 0.0
    %619 = vmatprep.subr.mxu0 0.0
    %620 = vmatpush1.msra.mxu0 0.0
    %621 = vmatprep.subr.mxu0 0.0
    %622 = vmatpush1.msra.mxu0 0.0
    %623 = vmatprep.subr.mxu0 0.0
    %624 = vmatpush1.msra.mxu0 0.0
    %625 = vmatprep.subr.mxu0 0.0
    %626 = vmatpush1.msra.mxu0 0.0
    %627 = vmatprep.subr.mxu0 0.0
    %628 = vmatpush1.msra.mxu0 0.0
    %629 = vmatprep.subr.mxu0 0.0
    %630 = vmatpush1.msra.mxu0 0.0
    %631 = vmatprep.subr.mxu0 0.0
    %632 = vmatpush1.msra.mxu0 0.0
    %633 = vmatprep.mubr.f32.mxu0 0.0
    %634 = vmatmul.mubr.f32.gmra.mrb[0].mxu0 %v558
    %v635 = vpop.f32.mrb[0].mxu0
    %v636 = vadd.f32 %v540, %v635
    %v637 = vpop.f32.mrb[0].mxu0
    %v638 = vadd.f32 %v540, %v637
    %639 = vmatprep.mubr.f32.mxu0 0.0
    %640 = vmatmul.mubr.f32.gmra.mrb[0].mxu0 %v561
    %v641 = vpop.f32.mrb[0].mxu0
    %v642 = vadd.f32 %v545, %v641
    %v643 = vpop.f32.mrb[0].mxu0
    %v644 = vadd.f32 %v545, %v643
    %645 = vmatprep.mubr.f32.mxu0 0.0
    %646 = vmatmul.mubr.f32.gmra.mrb[0].mxu0 %v564
    %v647 = vpop.f32.mrb[0].mxu0
    %v648 = vadd.f32 %v550, %v647
    %v649 = vpop.f32.mrb[0].mxu0
    %v650 = vadd.f32 %v550, %v649
    %651 = vmatprep.mubr.f32.mxu0 0.0
    %652 = vmatmul.mubr.f32.gmra.mrb[0].mxu0 %v567
    %v653 = vpop.f32.mrb[0].mxu0
    %v654 = vadd.f32 %v555, %v653
    %v655 = vpop.f32.mrb[0].mxu0
    %v656 = vadd.f32 %v555, %v655
    %657 = vdwg.mxu0
    %v658 = vtanh.pop %v636
    %v659 = vtanh.pop %v638
    %v660 = vtanh.pop %v642
    %v661 = vtanh.pop %v644
    %v662 = vsub.f32 0.0, %v648
    %v663 = vsub.f32 0.0, %v650
    %v664 = vsub.f32 0.0, %v654
    %v665 = vsub.f32 0.0, %v656
    %v666 = vmul.f32 %v662, 1.442695
    %v667 = vpow.pop %v666
    %v668 = vmul.f32 %v663, 1.442695
    %v669 = vpow.pop %v668
    %v670 = vmul.f32 %v664, 1.442695
    %v671 = vpow.pop %v670
    %v672 = vmul.f32 %v665, 1.442695
    %v673 = vpow.pop %v672
    %v674 = vadd.f32 %v667, 1.0
    %v675 = vadd.f32 %v669, 1.0
    %v676 = vadd.f32 %v671, 1.0
    %v677 = vadd.f32 %v673, 1.0
    %v678 = vrcp.pop %v674
    %v679 = vmul.f32 1.0, %v678
    %v680 = vrcp.pop %v675
    %v681 = vmul.f32 1.0, %v680
    %v682 = vrcp.pop %v676
    %v683 = vmul.f32 1.0, %v682
    %v684 = vrcp.pop %v677
    %v685 = vmul.f32 1.0, %v684
    %v686 = vmul.f32 %v658, %v679
    %v687 = vmul.f32 %v659, %v681
    %v688 = vmul.f32 %v660, %v683
    %v689 = vmul.f32 %v661, %v685
    %s690 = scalar_lea.vmem %s6, 16
    %v691 = vld [vmem:[%s690] sm:$0xff]
    %v692 = vld [vmem:[%s690 + $0x8] sm:$0xff]
    %s693 = scalar_lea.vmem %s7, 16
    %v694 = vld [vmem:[%s693] sm:$0xff]
    %v695 = vld [vmem:[%s693 + $0x8] sm:$0xff]
    %697 = vset.pattern.permute.xlu0 0
    %698 = vperm.xlu0 %697, %v694
    %v699 = vpop.permute.xlu0 %698
    %702 = vset.pattern.permute.xlu0 0
    %703 = vperm.xlu0 %702, %v695
    %v704 = vpop.permute.xlu0 %703
    %v707 = vsel %vm377, %v691, 0
    %v710 = vsel %vm377, %v692, 0
    %712 = vmatprep.subr.mxu0 %v687
    %713 = vmatpush1.msra.mxu0 %v686
    %714 = vmatprep.subr.mxu0 %v689
    %715 = vmatpush1.msra.mxu0 %v688
    %716 = vmatprep.subr.mxu0 0.0
    %717 = vmatpush1.msra.mxu0 0.0
    %718 = vmatprep.subr.mxu0 0.0
    %719 = vmatpush1.msra.mxu0 0.0
    %720 = vmatprep.subr.mxu0 0.0
    %721 = vmatpush1.msra.mxu0 0.0
    %722 = vmatprep.subr.mxu0 0.0
    %723 = vmatpush1.msra.mxu0 0.0
    %724 = vmatprep.subr.mxu0 0.0
    %725 = vmatpush1.msra.mxu0 0.0
    %726 = vmatprep.subr.mxu0 0.0
    %727 = vmatpush1.msra.mxu0 0.0
    %728 = vmatprep.subr.mxu0 0.0
    %729 = vmatpush1.msra.mxu0 0.0
    %730 = vmatprep.subr.mxu0 0.0
    %731 = vmatpush1.msra.mxu0 0.0
    %732 = vmatprep.subr.mxu0 0.0
    %733 = vmatpush1.msra.mxu0 0.0
    %734 = vmatprep.subr.mxu0 0.0
    %735 = vmatpush1.msra.mxu0 0.0
    %736 = vmatprep.subr.mxu0 0.0
    %737 = vmatpush1.msra.mxu0 0.0
    %738 = vmatprep.subr.mxu0 0.0
    %739 = vmatpush1.msra.mxu0 0.0
    %740 = vmatprep.subr.mxu0 0.0
    %741 = vmatpush1.msra.mxu0 0.0
    %742 = vmatprep.subr.mxu0 0.0
    %743 = vmatpush1.msra.mxu0 0.0
    %744 = vmatprep.subr.mxu0 0.0
    %745 = vmatpush1.msra.mxu0 0.0
    %746 = vmatprep.subr.mxu0 0.0
    %747 = vmatpush1.msra.mxu0 0.0
    %748 = vmatprep.subr.mxu0 0.0
    %749 = vmatpush1.msra.mxu0 0.0
    %750 = vmatprep.subr.mxu0 0.0
    %751 = vmatpush1.msra.mxu0 0.0
    %752 = vmatprep.subr.mxu0 0.0
    %753 = vmatpush1.msra.mxu0 0.0
    %754 = vmatprep.subr.mxu0 0.0
    %755 = vmatpush1.msra.mxu0 0.0
    %756 = vmatprep.subr.mxu0 0.0
    %757 = vmatpush1.msra.mxu0 0.0
    %758 = vmatprep.subr.mxu0 0.0
    %759 = vmatpush1.msra.mxu0 0.0
    %760 = vmatprep.subr.mxu0 0.0
    %761 = vmatpush1.msra.mxu0 0.0
    %762 = vmatprep.subr.mxu0 0.0
    %763 = vmatpush1.msra.mxu0 0.0
    %764 = vmatprep.subr.mxu0 0.0
    %765 = vmatpush1.msra.mxu0 0.0
    %766 = vmatprep.subr.mxu0 0.0
    %767 = vmatpush1.msra.mxu0 0.0
    %768 = vmatprep.subr.mxu0 0.0
    %769 = vmatpush1.msra.mxu0 0.0
    %770 = vmatprep.subr.mxu0 0.0
    %771 = vmatpush1.msra.mxu0 0.0
    %772 = vmatprep.subr.mxu0 0.0
    %773 = vmatpush1.msra.mxu0 0.0
    %774 = vmatprep.subr.mxu0 0.0
    %775 = vmatpush1.msra.mxu0 0.0
    %776 = vmatprep.mubr.f32.mxu0 0.0
    %777 = vmatmul.mubr.f32.gmra.mrb[0].mxu0 %v707
    %v778 = vpop.f32.mrb[0].mxu0
    %v779 = vadd.f32 %v699, %v778
    %v780 = vpop.f32.mrb[0].mxu0
    %v781 = vadd.f32 %v699, %v780
    %782 = vmatprep.mubr.f32.mxu0 0.0
    %783 = vmatmul.mubr.f32.gmra.mrb[0].mxu0 %v710
    %v784 = vpop.f32.mrb[0].mxu0
    %v785 = vadd.f32 %v704, %v784
    %v786 = vpop.f32.mrb[0].mxu0
    %v787 = vadd.f32 %v704, %v786
    %788 = vdwg.mxu0
    %v789 = vadd.f32 %v461, %v779
    %v790 = vadd.f32 %v462, %v781
    %v791 = vadd.f32 %v463, %v785
    %v792 = vadd.f32 %v464, %v787
    %793 = vrot.lane.b32.xlu0 %v779, 4
    %v794 = vpop.permute.xlu0 %793
    %795 = vrot.lane.b32.xlu0 %v785, 4
    %v796 = vpop.permute.xlu0 %795
    %797 = vrot.lane.b32.xlu0 %v781, 4
    %v798 = vpop.permute.xlu0 %797
    %799 = vrot.lane.b32.xlu0 %v787, 4
    %v800 = vpop.permute.xlu0 %799
    %vm801 = vcmp.lt.s32.totalorder %v146, 4
    %v802 = vsel %vm801, %v794, %v798
    %v803 = vsel %vm801, %v796, %v800
    %v804 = vsel %vm801, %v798, %v794
    %v805 = vsel %vm801, %v800, %v796
    %vm806 = vcmp.ge.s32.totalorder %v31, 4
    %vm807 = vcmp.lt.s32.totalorder %v31, 100
    %vm808 = vmand %vm806, %vm807
    %v809 = vsel %vm808, 1, 0
    %v810 = vlaneseq
    %v811 = vshrl.u32 %v810, 7
    %v812 = vsub.s32 0, %v811
    %v813 = vrot.slane %v809, %v812
    %v814 = vlaneseq
    %v815 = vshrl.u32 %v814, 7
    %v816 = vsub.s32 1, %v815
    %v817 = vrot.slane %v809, %v816
    %vm818 = vcmp.eq.s32.totalorder %v813, 1
    %vm819 = vcmp.eq.s32.totalorder %v817, 1
    %v820 = vsel %vm818, %v804, 0.0
    %v821 = vsel %vm819, %v802, 0.0
    %v822 = vsel %vm818, %v805, 0.0
    %v823 = vsel %vm819, %v803, 0.0
    %824 = vrot.lane.b32.xlu0 %v779, 124
    %v825 = vpop.permute.xlu0 %824
    %826 = vrot.lane.b32.xlu0 %v785, 124
    %v827 = vpop.permute.xlu0 %826
    %828 = vrot.lane.b32.xlu0 %v781, 124
    %v829 = vpop.permute.xlu0 %828
    %830 = vrot.lane.b32.xlu0 %v787, 124
    %v831 = vpop.permute.xlu0 %830
    %vm832 = vcmp.lt.s32.totalorder %v146, 124
    %v833 = vsel %vm832, %v825, %v829
    %v834 = vsel %vm832, %v827, %v831
    %v835 = vsel %vm832, %v829, %v825
    %v836 = vsel %vm832, %v831, %v827
    %vm837 = vcmp.ge.s32.totalorder %v31, 4294967292
    %vm838 = vcmp.lt.s32.totalorder %v31, 92
    %vm839 = vmand %vm837, %vm838
    %v840 = vsel %vm839, 1, 0
    %v841 = vlaneseq
    %v842 = vshrl.u32 %v841, 7
    %v843 = vsub.s32 0, %v842
    %v844 = vrot.slane %v840, %v843
    %v845 = vlaneseq
    %v846 = vshrl.u32 %v845, 7
    %v847 = vsub.s32 1, %v846
    %v848 = vrot.slane %v840, %v847
    %vm849 = vcmp.eq.s32.totalorder %v844, 1
    %vm850 = vcmp.eq.s32.totalorder %v848, 1
    %v851 = vsel %vm849, %v833, 0.0
    %v852 = vsel %vm850, %v835, 0.0
    %v853 = vsel %vm849, %v834, 0.0
    %v854 = vsel %vm850, %v836, 0.0
    %s855 = scalar_lea.vmem %s4, 64
    %v856 = vld [vmem:[%s855] sm:$0xff]
    %v857 = vld [vmem:[%s855 + $0x8] sm:$0xff]
    %v858 = vld [vmem:[%s855 + $0x10] sm:$0xff]
    %v859 = vld [vmem:[%s855 + $0x18] sm:$0xff]
    %s860 = scalar_lea.vmem %s5, 64
    %v861 = vld [vmem:[%s860] sm:$0xff]
    %v862 = vld [vmem:[%s860 + $0x8] sm:$0xff]
    %v863 = vld [vmem:[%s860 + $0x10] sm:$0xff]
    %v864 = vld [vmem:[%s860 + $0x18] sm:$0xff]
    %866 = vset.pattern.permute.xlu0 0
    %867 = vperm.xlu0 %866, %v861
    %v868 = vpop.permute.xlu0 %867
    %871 = vset.pattern.permute.xlu0 0
    %872 = vperm.xlu0 %871, %v862
    %v873 = vpop.permute.xlu0 %872
    %876 = vset.pattern.permute.xlu0 0
    %877 = vperm.xlu0 %876, %v863
    %v878 = vpop.permute.xlu0 %877
    %881 = vset.pattern.permute.xlu0 0
    %882 = vperm.xlu0 %881, %v864
    %v883 = vpop.permute.xlu0 %882
    %v886 = vsel %vm229, %v856, 0
    %v889 = vsel %vm229, %v857, 0
    %v892 = vsel %vm229, %v858, 0
    %v895 = vsel %vm229, %v859, 0
    %897 = vmatprep.subr.mxu0 %v821
    %898 = vmatpush1.msra.mxu0 %v820
    %899 = vmatprep.subr.mxu0 %v823
    %900 = vmatpush1.msra.mxu0 %v822
    %901 = vmatprep.subr.mxu0 %v781
    %902 = vmatpush1.msra.mxu0 %v779
    %903 = vmatprep.subr.mxu0 %v787
    %904 = vmatpush1.msra.mxu0 %v785
    %905 = vmatprep.subr.mxu0 %v852
    %906 = vmatpush1.msra.mxu0 %v851
    %907 = vmatprep.subr.mxu0 %v854
    %908 = vmatpush1.msra.mxu0 %v853
    %909 = vmatprep.subr.mxu0 0.0
    %910 = vmatpush1.msra.mxu0 0.0
    %911 = vmatprep.subr.mxu0 0.0
    %912 = vmatpush1.msra.mxu0 0.0
    %913 = vmatprep.subr.mxu0 0.0
    %914 = vmatpush1.msra.mxu0 0.0
    %915 = vmatprep.subr.mxu0 0.0
    %916 = vmatpush1.msra.mxu0 0.0
    %917 = vmatprep.subr.mxu0 0.0
    %918 = vmatpush1.msra.mxu0 0.0
    %919 = vmatprep.subr.mxu0 0.0
    %920 = vmatpush1.msra.mxu0 0.0
    %921 = vmatprep.subr.mxu0 0.0
    %922 = vmatpush1.msra.mxu0 0.0
    %923 = vmatprep.subr.mxu0 0.0
    %924 = vmatpush1.msra.mxu0 0.0
    %925 = vmatprep.subr.mxu0 0.0
    %926 = vmatpush1.msra.mxu0 0.0
    %927 = vmatprep.subr.mxu0 0.0
    %928 = vmatpush1.msra.mxu0 0.0
    %929 = vmatprep.subr.mxu0 0.0
    %930 = vmatpush1.msra.mxu0 0.0
    %931 = vmatprep.subr.mxu0 0.0
    %932 = vmatpush1.msra.mxu0 0.0
    %933 = vmatprep.subr.mxu0 0.0
    %934 = vmatpush1.msra.mxu0 0.0
    %935 = vmatprep.subr.mxu0 0.0
    %936 = vmatpush1.msra.mxu0 0.0
    %937 = vmatprep.subr.mxu0 0.0
    %938 = vmatpush1.msra.mxu0 0.0
    %939 = vmatprep.subr.mxu0 0.0
    %940 = vmatpush1.msra.mxu0 0.0
    %941 = vmatprep.subr.mxu0 0.0
    %942 = vmatpush1.msra.mxu0 0.0
    %943 = vmatprep.subr.mxu0 0.0
    %944 = vmatpush1.msra.mxu0 0.0
    %945 = vmatprep.subr.mxu0 0.0
    %946 = vmatpush1.msra.mxu0 0.0
    %947 = vmatprep.subr.mxu0 0.0
    %948 = vmatpush1.msra.mxu0 0.0
    %949 = vmatprep.subr.mxu0 0.0
    %950 = vmatpush1.msra.mxu0 0.0
    %951 = vmatprep.subr.mxu0 0.0
    %952 = vmatpush1.msra.mxu0 0.0
    %953 = vmatprep.subr.mxu0 0.0
    %954 = vmatpush1.msra.mxu0 0.0
    %955 = vmatprep.subr.mxu0 0.0
    %956 = vmatpush1.msra.mxu0 0.0
    %957 = vmatprep.subr.mxu0 0.0
    %958 = vmatpush1.msra.mxu0 0.0
    %959 = vmatprep.subr.mxu0 0.0
    %960 = vmatpush1.msra.mxu0 0.0
    %961 = vmatprep.mubr.f32.mxu0 0.0
    %962 = vmatmul.mubr.f32.gmra.mrb[0].mxu0 %v886
    %v963 = vpop.f32.mrb[0].mxu0
    %v964 = vadd.f32 %v868, %v963
    %v965 = vpop.f32.mrb[0].mxu0
    %v966 = vadd.f32 %v868, %v965
    %967 = vmatprep.mubr.f32.mxu0 0.0
    %968 = vmatmul.mubr.f32.gmra.mrb[0].mxu0 %v889
    %v969 = vpop.f32.mrb[0].mxu0
    %v970 = vadd.f32 %v873, %v969
    %v971 = vpop.f32.mrb[0].mxu0
    %v972 = vadd.f32 %v873, %v971
    %973 = vmatprep.mubr.f32.mxu0 0.0
    %974 = vmatmul.mubr.f32.gmra.mrb[0].mxu0 %v892
    %v975 = vpop.f32.mrb[0].mxu0
    %v976 = vadd.f32 %v878, %v975
    %v977 = vpop.f32.mrb[0].mxu0
    %v978 = vadd.f32 %v878, %v977
    %979 = vmatprep.mubr.f32.mxu0 0.0
    %980 = vmatmul.mubr.f32.gmra.mrb[0].mxu0 %v895
    %v981 = vpop.f32.mrb[0].mxu0
    %v982 = vadd.f32 %v883, %v981
    %v983 = vpop.f32.mrb[0].mxu0
    %v984 = vadd.f32 %v883, %v983
    %985 = vdwg.mxu0
    %v986 = vtanh.pop %v964
    %v987 = vtanh.pop %v966
    %v988 = vtanh.pop %v970
    %v989 = vtanh.pop %v972
    %v990 = vsub.f32 0.0, %v976
    %v991 = vsub.f32 0.0, %v978
    %v992 = vsub.f32 0.0, %v982
    %v993 = vsub.f32 0.0, %v984
    %v994 = vmul.f32 %v990, 1.442695
    %v995 = vpow.pop %v994
    %v996 = vmul.f32 %v991, 1.442695
    %v997 = vpow.pop %v996
    %v998 = vmul.f32 %v992, 1.442695
    %v999 = vpow.pop %v998
    %v1000 = vmul.f32 %v993, 1.442695
    %v1001 = vpow.pop %v1000
    %v1002 = vadd.f32 %v995, 1.0
    %v1003 = vadd.f32 %v997, 1.0
    %v1004 = vadd.f32 %v999, 1.0
    %v1005 = vadd.f32 %v1001, 1.0
    %v1006 = vrcp.pop %v1002
    %v1007 = vmul.f32 1.0, %v1006
    %v1008 = vrcp.pop %v1003
    %v1009 = vmul.f32 1.0, %v1008
    %v1010 = vrcp.pop %v1004
    %v1011 = vmul.f32 1.0, %v1010
    %v1012 = vrcp.pop %v1005
    %v1013 = vmul.f32 1.0, %v1012
    %v1014 = vmul.f32 %v986, %v1007
    %v1015 = vmul.f32 %v987, %v1009
    %v1016 = vmul.f32 %v988, %v1011
    %v1017 = vmul.f32 %v989, %v1013
    %s1018 = scalar_lea.vmem %s6, 32
    %v1019 = vld [vmem:[%s1018] sm:$0xff]
    %v1020 = vld [vmem:[%s1018 + $0x8] sm:$0xff]
    %s1021 = scalar_lea.vmem %s7, 32
    %v1022 = vld [vmem:[%s1021] sm:$0xff]
    %v1023 = vld [vmem:[%s1021 + $0x8] sm:$0xff]
    %1025 = vset.pattern.permute.xlu0 0
    %1026 = vperm.xlu0 %1025, %v1022
    %v1027 = vpop.permute.xlu0 %1026
    %1030 = vset.pattern.permute.xlu0 0
    %1031 = vperm.xlu0 %1030, %v1023
    %v1032 = vpop.permute.xlu0 %1031
    %v1035 = vsel %vm377, %v1019, 0
    %v1038 = vsel %vm377, %v1020, 0
    %1040 = vmatprep.subr.mxu0 %v1015
    %1041 = vmatpush1.msra.mxu0 %v1014
    %1042 = vmatprep.subr.mxu0 %v1017
    %1043 = vmatpush1.msra.mxu0 %v1016
    %1044 = vmatprep.subr.mxu0 0.0
    %1045 = vmatpush1.msra.mxu0 0.0
    %1046 = vmatprep.subr.mxu0 0.0
    %1047 = vmatpush1.msra.mxu0 0.0
    %1048 = vmatprep.subr.mxu0 0.0
    %1049 = vmatpush1.msra.mxu0 0.0
    %1050 = vmatprep.subr.mxu0 0.0
    %1051 = vmatpush1.msra.mxu0 0.0
    %1052 = vmatprep.subr.mxu0 0.0
    %1053 = vmatpush1.msra.mxu0 0.0
    %1054 = vmatprep.subr.mxu0 0.0
    %1055 = vmatpush1.msra.mxu0 0.0
    %1056 = vmatprep.subr.mxu0 0.0
    %1057 = vmatpush1.msra.mxu0 0.0
    %1058 = vmatprep.subr.mxu0 0.0
    %1059 = vmatpush1.msra.mxu0 0.0
    %1060 = vmatprep.subr.mxu0 0.0
    %1061 = vmatpush1.msra.mxu0 0.0
    %1062 = vmatprep.subr.mxu0 0.0
    %1063 = vmatpush1.msra.mxu0 0.0
    %1064 = vmatprep.subr.mxu0 0.0
    %1065 = vmatpush1.msra.mxu0 0.0
    %1066 = vmatprep.subr.mxu0 0.0
    %1067 = vmatpush1.msra.mxu0 0.0
    %1068 = vmatprep.subr.mxu0 0.0
    %1069 = vmatpush1.msra.mxu0 0.0
    %1070 = vmatprep.subr.mxu0 0.0
    %1071 = vmatpush1.msra.mxu0 0.0
    %1072 = vmatprep.subr.mxu0 0.0
    %1073 = vmatpush1.msra.mxu0 0.0
    %1074 = vmatprep.subr.mxu0 0.0
    %1075 = vmatpush1.msra.mxu0 0.0
    %1076 = vmatprep.subr.mxu0 0.0
    %1077 = vmatpush1.msra.mxu0 0.0
    %1078 = vmatprep.subr.mxu0 0.0
    %1079 = vmatpush1.msra.mxu0 0.0
    %1080 = vmatprep.subr.mxu0 0.0
    %1081 = vmatpush1.msra.mxu0 0.0
    %1082 = vmatprep.subr.mxu0 0.0
    %1083 = vmatpush1.msra.mxu0 0.0
    %1084 = vmatprep.subr.mxu0 0.0
    %1085 = vmatpush1.msra.mxu0 0.0
    %1086 = vmatprep.subr.mxu0 0.0
    %1087 = vmatpush1.msra.mxu0 0.0
    %1088 = vmatprep.subr.mxu0 0.0
    %1089 = vmatpush1.msra.mxu0 0.0
    %1090 = vmatprep.subr.mxu0 0.0
    %1091 = vmatpush1.msra.mxu0 0.0
    %1092 = vmatprep.subr.mxu0 0.0
    %1093 = vmatpush1.msra.mxu0 0.0
    %1094 = vmatprep.subr.mxu0 0.0
    %1095 = vmatpush1.msra.mxu0 0.0
    %1096 = vmatprep.subr.mxu0 0.0
    %1097 = vmatpush1.msra.mxu0 0.0
    %1098 = vmatprep.subr.mxu0 0.0
    %1099 = vmatpush1.msra.mxu0 0.0
    %1100 = vmatprep.subr.mxu0 0.0
    %1101 = vmatpush1.msra.mxu0 0.0
    %1102 = vmatprep.subr.mxu0 0.0
    %1103 = vmatpush1.msra.mxu0 0.0
    %1104 = vmatprep.mubr.f32.mxu0 0.0
    %1105 = vmatmul.mubr.f32.gmra.mrb[0].mxu0 %v1035
    %v1106 = vpop.f32.mrb[0].mxu0
    %v1107 = vadd.f32 %v1027, %v1106
    %v1108 = vpop.f32.mrb[0].mxu0
    %v1109 = vadd.f32 %v1027, %v1108
    %1110 = vmatprep.mubr.f32.mxu0 0.0
    %1111 = vmatmul.mubr.f32.gmra.mrb[0].mxu0 %v1038
    %v1112 = vpop.f32.mrb[0].mxu0
    %v1113 = vadd.f32 %v1032, %v1112
    %v1114 = vpop.f32.mrb[0].mxu0
    %v1115 = vadd.f32 %v1032, %v1114
    %1116 = vdwg.mxu0
    %v1117 = vadd.f32 %v789, %v1107
    %v1118 = vadd.f32 %v790, %v1109
    %v1119 = vadd.f32 %v791, %v1113
    %v1120 = vadd.f32 %v792, %v1115
    %1121 = vst [vmem:[#allocation2] sm:$0xff] %v1117
    %1122 = vst [vmem:[#allocation2 + $0x8] sm:$0xff] %v1118
    %1123 = vst [vmem:[#allocation2 + $0x10] sm:$0xff] %v1119
    %1124 = vst [vmem:[#allocation2 + $0x18] sm:$0xff] %v1120
    // Predicated region
    $region34: #{tpu_custom_call.1} parent=1 // pred_check
      _
    $region35: #{tpu_custom_call.1} parent=1 // pred_check_branch
      %1126 = sbr.rel (0) target = $region37
    $region36: #{tpu_custom_call.1} parent=1 // pred_region
      %s1128 = ssub.s32 512, 512
      %1129 = vsyncadd [#allocation3], %s1128
      %s1130 = sshll.u32 [#allocation2], 4
      %s1131 = int_to_ptr.vmem [resolvable:$true] %s1130
      %1136 = dma.vmem_to_hbm [thread:$0]  %s1131, 512, %s8, [#allocation3], 256, 256, 16
    $region37: #{tpu_custom_call.1} parent=1 // pred_fallthru
      _
    // Predicated region
    $region38: #{tpu_custom_call.1} parent=1 // pred_check
      _
    $region39: #{tpu_custom_call.1} parent=1 // pred_check_branch
      %1138 = sbr.rel (0) target = $region41
    $region40: #{tpu_custom_call.1} parent=1 // pred_region
      %1139 = dma.done [#allocation3], 512
    $region41: #{tpu_custom_call.1} parent=1 // pred_fallthru
      _
    %1140 = vsyncpa [#allocation3], 1

</llo_original>
